<compile_context>
chip_gen: v7x
topology: tpu7x:2x2x1
jax: 0.10.0
libtpu: 0.0.40
codegen_flags: <defaults>
</compile_context>

<pallas_src>
import functools

import jax
import jax.numpy as jnp
from jax.experimental import pallas as pl
from jax.experimental.pallas import tpu as pltpu


def _round_up(x: int, m: int) -> int:
    return ((x + m - 1) // m) * m


def _cdiv(a: int, b: int) -> int:
    return -(-a // b)


def _lowest(dtype):
    dtype = jnp.dtype(dtype)
    if jnp.issubdtype(dtype, jnp.floating):
        return jnp.array(-jnp.inf, dtype)
    return jnp.array(jnp.iinfo(dtype).min, dtype)


def _max_pool_kernel(x_ref, o_ref, *, seq_len, seq_tile, tiles_per_chunk, needs_mask):
    # x_ref: (TB, TT, TD) input tile for this (chunk, batch, embed, seq) step.
    # o_ref: (TB, TD) output-resident running-max block, revisited across the
    #        trailing ("arbitrary") sequence-tile axis.
    t = pl.program_id(3)
    x = x_ref[...]

    if needs_mask:
        # Ragged / redundant sequence tiles: positions >= T hold garbage (not
        # zeros), so they must be forced to the max-identity before reducing.
        # One compare+select per input vreg — fully hidden under the HBM DMA.
        p = pl.program_id(0)
        seq_start = (p * tiles_per_chunk + t) * seq_tile
        pos = seq_start + jax.lax.broadcasted_iota(jnp.int32, x.shape, 1)
        x = jnp.where(pos < seq_len, x, _lowest(x.dtype))

    tile_max = jnp.max(x, axis=1)

    @pl.when(t == 0)
    def _():
        # Fused init: first sequence tile writes directly (no -inf init pass).
        o_ref[...] = tile_max

    @pl.when(t != 0)
    def _():
        o_ref[...] = jnp.maximum(o_ref[...], tile_max)


def max_pooling(
    x: jax.Array,
    length=None,
    *,
    budget_bytes: int = 8 * 1024 * 1024,
    min_pallas_bytes: int = 1 << 16,
) -> jax.Array:
    """Pallas equivalent of MaxPooling.forward(x, length).

    x: (B, T, D) -> (B, D) (max over the sequence axis).
    `length` is ignored, matching the reference module.
    # TODO(synk): the reference max also includes padded sequence positions;
    # if padding values can exceed real values, mask them to -inf using `length`.
    """
    assert x.ndim == 3
    B, T, D = x.shape
    itemsize = jnp.dtype(x.dtype).itemsize

    # Tiny problems: fixed pallas_call overhead dwarfs the work; let XLA fuse.
    if B * T * D * itemsize < min_pallas_bytes:
        return jnp.max(x, axis=1)

    # Sublane packing: 8 rows for 4-byte, 16 for 2-byte, 32 for 1-byte dtypes.
    sub = max(8, 32 // itemsize)
    lane = 128

    # Batch rows per step: full B for small batches (no padded-row HBM
    # traffic), otherwise one sublane group.
    TB = B if B < sub else sub

    # Embedding (lane) tile: prefer the full row so each (batch row, seq tile)
    # is one contiguous HBM slab; cap only if full-D would push TT below `sub`.
    if budget_bytes // (TB * D * itemsize) >= sub:
        TD = D
    else:
        TD = max(lane, (budget_bytes // (TB * sub * itemsize)) // lane * lane)
        TD = min(TD, _round_up(D, lane))

    # Sequence tile: as large as the per-block byte budget allows (bounded
    # VMEM regardless of T); full T if it already fits in one block.
    tt_budget = max(sub, (budget_bytes // (TB * TD * itemsize)) // sub * sub)
    TT = T if T <= tt_budget else tt_budget

    grid_b = _cdiv(B, TB)
    grid_d = _cdiv(D, TD)
    n_seq_tiles = _cdiv(T, TT)

    # v7x megacore: if all work would sit on the serial sequence axis, split
    # it into 2 parallel partial-max chunks (combined outside the kernel).
    n_chunks = 2 if (grid_b * grid_d == 1 and n_seq_tiles >= 2) else 1
    tiles_per_chunk = _cdiv(n_seq_tiles, n_chunks)

    # Mask needed iff the iterated tiles overshoot T (ragged last tile and/or
    # redundant clamped tiles from the chunk split).
    needs_mask = (n_chunks * tiles_per_chunk * TT) != T

    kernel = functools.partial(
        _max_pool_kernel,
        seq_len=T,
        seq_tile=TT,
        tiles_per_chunk=tiles_per_chunk,
        needs_mask=needs_mask,
    )

    last_tile = n_seq_tiles - 1

    def x_map(p, b, d, t):
        seq_idx = p * tiles_per_chunk + t
        if n_chunks > 1:
            # Clamp redundant trailing tiles of the last chunk to a valid
            # block; the kernel masks them entirely (seq_start >= T).
            seq_idx = jnp.minimum(seq_idx, last_tile)
        return (b, seq_idx, d)

    if n_chunks == 1:
        out_shape = jax.ShapeDtypeStruct((B, D), x.dtype)
        out_spec = pl.BlockSpec((TB, TD), lambda p, b, d, t: (b, d))
    else:
        out_shape = jax.ShapeDtypeStruct((n_chunks, B, D), x.dtype)
        out_spec = pl.BlockSpec((None, TB, TD), lambda p, b, d, t: (p, b, d))

    out = pl.pallas_call(
        kernel,
        out_shape=out_shape,
        grid_spec=pltpu.PrefetchScalarGridSpec(
            num_scalar_prefetch=0,
            grid=(n_chunks, grid_b, grid_d, tiles_per_chunk),
            in_specs=[pl.BlockSpec((TB, TT, TD), x_map)],
            out_specs=out_spec,
        ),
        compiler_params=pltpu.CompilerParams(
            dimension_semantics=("parallel", "parallel", "parallel", "arbitrary"),
            vmem_limit_bytes=32 * 1024 * 1024,
        ),
    )(x)

    if n_chunks == 1:
        return out
    return jnp.maximum(out[0], out[1])


if __name__ == "__main__":
    key = jax.random.PRNGKey(0)
    k1, k2, k3 = jax.random.split(key, 3)

    # Test 1: shapes implied by the module (batch=2, seq=8, document_embedding_dims=32).
    # min_pallas_bytes=0 forces the Pallas path even at this toy size
    # (exercises full-dim TB/TD/TT blocks with no padding or masking).
    B, T, D = 2, 8, 32
    x = jax.random.normal(k1, (B, T, D), dtype=jnp.float32)
    length = jnp.full((B,), T, dtype=jnp.int32)  # accepted but unused, as in the reference
    out = jax.block_until_ready(max_pooling(x, length, min_pallas_bytes=0))
    ref = jnp.max(x, axis=1)
    assert out.shape == (B, D)
    assert jnp.allclose(out, ref), "f32 mismatch vs reference max-pool"

    # Test 2: non-aligned bf16 case (B=16, T=300, D=200): full-dim blocks,
    # ragged-free single-tile sequence axis, lane dim equal to full D.
    B2, T2, D2 = 16, 300, 200
    x2 = jax.random.normal(k2, (B2, T2, D2), dtype=jnp.bfloat16)
    out2 = jax.block_until_ready(max_pooling(x2, None, min_pallas_bytes=0))
    ref2 = jnp.max(x2, axis=1)
    assert out2.shape == (B2, D2)
    assert jnp.allclose(out2.astype(jnp.float32), ref2.astype(jnp.float32)), \
        "bf16 mismatch vs reference max-pool"

    # Test 3: small byte budget forces a multi-tile sequence axis, the 2-way
    # parallel chunk split (grid_b*grid_d == 1), the clamped redundant tile,
    # and in-kernel ragged masking (T=70 not a multiple of TT=16).
    B3, T3, D3 = 4, 70, 256
    x3 = jax.random.normal(k3, (B3, T3, D3), dtype=jnp.float32)
    out3 = jax.block_until_ready(
        max_pooling(x3, None, budget_bytes=1 << 16, min_pallas_bytes=0))
    ref3 = jnp.max(x3, axis=1)
    assert out3.shape == (B3, D3)
    assert jnp.allclose(out3, ref3), "chunked/masked mismatch vs reference max-pool"

    print("KERNEL_OK")
</pallas_src>

<mosaic_0001>
module attributes {stable_mosaic.version = 11 : i64} {
  func.func @_max_pool_kernel(%arg0: i32, %arg1: i32, %arg2: i32, %arg3: i32, %arg4: memref<2x8x32xf32, #tpu.memory_space<vmem>>, %arg5: memref<2x32xf32, #tpu.memory_space<vmem>>) attributes {dimension_semantics = [#tpu.dimension_semantics<parallel>, #tpu.dimension_semantics<parallel>, #tpu.dimension_semantics<parallel>, #tpu.dimension_semantics<arbitrary>], iteration_bounds = array<i64: 1, 1, 1, 1>, scalar_prefetch = 0 : i64, scratch_operands = 0 : i64, tpu.core_type = #tpu.core_type<tc>, window_params = [{transform_indices = @transform_0, window_bounds = array<i64: 2, 8, 32>}, {transform_indices = @transform_1, window_bounds = array<i64: 2, 32>}]} {
    %c0 = arith.constant 0 : index
    %c0_0 = arith.constant 0 : index
    %c0_1 = arith.constant 0 : index
    %0 = vector.load %arg4[%c0, %c0_0, %c0_1] : memref<2x8x32xf32, #tpu.memory_space<vmem>>, vector<2x8x32xf32>
    %cst = arith.constant dense<0xFF800000> : vector<2x32xf32>
    %1 = vector.multi_reduction <maximumf>, %0, %cst [1] : vector<2x8x32xf32> to vector<2x32xf32>
    %c0_i32 = arith.constant 0 : i32
    %2 = arith.cmpi eq, %arg3, %c0_i32 : i32
    %3 = arith.extui %2 : i1 to i32
    %c0_i32_2 = arith.constant 0 : i32
    %4 = arith.cmpi ne, %3, %c0_i32_2 : i32
    scf.if %4 {
      %c0_5 = arith.constant 0 : index
      %c0_6 = arith.constant 0 : index
      %8 = vector.load %arg5[%c0_5, %c0_6] : memref<2x32xf32, #tpu.memory_space<vmem>>, vector<2x32xf32>
      tpu.vector_store %arg5[%c0_5, %c0_6], %1 {strides = array<i32>} : memref<2x32xf32, #tpu.memory_space<vmem>>, vector<2x32xf32>,
    } else {
    }
    %c0_i32_3 = arith.constant 0 : i32
    %5 = arith.cmpi ne, %arg3, %c0_i32_3 : i32
    %6 = arith.extui %5 : i1 to i32
    %c0_i32_4 = arith.constant 0 : i32
    %7 = arith.cmpi ne, %6, %c0_i32_4 : i32
    scf.if %7 {
      %c0_5 = arith.constant 0 : index
      %c0_6 = arith.constant 0 : index
      %8 = vector.load %arg5[%c0_5, %c0_6] : memref<2x32xf32, #tpu.memory_space<vmem>>, vector<2x32xf32>
      %9 = arith.maximumf %8, %1 : vector<2x32xf32>
      %c0_7 = arith.constant 0 : index
      %c0_8 = arith.constant 0 : index
      %10 = vector.load %arg5[%c0_7, %c0_8] : memref<2x32xf32, #tpu.memory_space<vmem>>, vector<2x32xf32>
      tpu.vector_store %arg5[%c0_7, %c0_8], %9 {strides = array<i32>} : memref<2x32xf32, #tpu.memory_space<vmem>>, vector<2x32xf32>,
    } else {
    }
    return
  }
  func.func @transform_0(%arg0: i32, %arg1: i32, %arg2: i32, %arg3: i32) -> (i32, i32, i32) {
    %c1_i32 = arith.constant 1 : i32
    %0 = arith.muli %arg0, %c1_i32 : i32
    %1 = arith.addi %0, %arg3 : i32
    %c0_i32 = arith.constant 0 : i32
    return %arg1, %1, %arg2 : i32, i32, i32
  }
  func.func @transform_1(%arg0: i32, %arg1: i32, %arg2: i32, %arg3: i32) -> (i32, i32) {
    %c0_i32 = arith.constant 0 : i32
    return %arg1, %arg2 : i32, i32
  }
}

</mosaic_0001>

<llo_original>
// kernel: tpu_custom_call.1
$region0: #{tpu_custom_call.1}
  #allocation0 [shape = 'u32[]', space=smem, size = 0x4, offset = 0x4, fixed_abs, tag = 'smem constant byte address 0x4 - core index']
  #allocation1 [shape = 'u32[144,128]{1,0:T(1,128)}', space=vmem, size = 0x12000, scoped, tag = 'internal scratch']
  %s0 = inlined_call_operand.hbm [shape: f32[2,8,32], index: 0, kind: input, shape index: {}]
  %s1 = inlined_call_operand.hbm [shape: f32[2,32], index: 1, kind: output, shape index: {}]
  %s2 = sld [smem:[#allocation0]]
  $region26: #{tpu_custom_call.1} parent=0
    _
  %s4 = ssub.s32 1, %s2
  %s5 = scalar_select 0, %s4, %s2
  $region1: #{tpu_custom_call.1} parent=0
    #allocation2 [shape = 'u8[8192]{0}', space=vmem, size = 0x2000, scoped, tag = 'input window, operand 0, single buffered']
    #allocation3 [shape = 's32[1]{0}', space=sflag, size = 0x4, scoped, tag = 'scoped memory for tpu_custom_call.1']
    #allocation4 [shape = 's32[1]{0}', space=sflag, size = 0x4, scoped, tag = 'scoped memory for tpu_custom_call.1']
    #allocation5 [shape = 'u8[1024]{0}', space=vmem, size = 0x400, scoped, tag = 'output window, operand 0, single buffered']
    %6 = vsyncpa [#allocation3], 0
    %7 = vsyncpa [#allocation4], 0
    // Predicated region
    $region2: #{tpu_custom_call.1} parent=1 // pred_check
      _
    $region3: #{tpu_custom_call.1} parent=1 // pred_check_branch
      %9 = sbr.rel (0) target = $region5
    $region4: #{tpu_custom_call.1} parent=1 // pred_region
      %s10 = sadd.s32 0, 0
      %s12 = ssub.s32 256, 256
      %13 = vsyncadd [#allocation3], %s12
      %s14 = smul.addr %s10, 128
      %s15 = scalar_lea.hbm %s0, %s14
      %s16 = sshll.u32 [#allocation2], 4
      %s17 = int_to_ptr.vmem [resolvable:$true] %s16
      %22 = dma.hbm_to_vmem [thread:$0]  %s15, 256, %s17, [#allocation3], 128, 128, 8
    $region5: #{tpu_custom_call.1} parent=1 // pred_fallthru
      _
    // Predicated region
    $region6: #{tpu_custom_call.1} parent=1 // pred_check
      _
    $region7: #{tpu_custom_call.1} parent=1 // pred_check_branch
      %24 = sbr.rel (0) target = $region9
    $region8: #{tpu_custom_call.1} parent=1 // pred_region
      %25 = dma.done [#allocation3], 256
    $region9: #{tpu_custom_call.1} parent=1 // pred_fallthru
      _
    %s26 = sadd.s32 0, 0
    %v27 = vld [vmem:[#allocation2] sm:$0xff]
    %v28 = vld [vmem:[#allocation2 + $0x8] sm:$0xff]
    %vm29 = vcmask 261120
    %v30 = vsel %vm29, %v27, -inf
    %v31 = vrot.slane %v30, 4
    %v32 = vmax.f32 %v30, %v31
    %v33 = vrot.slane %v32, 2
    %v34 = vmax.f32 %v32, %v33
    %v35 = vrot.slane %v34, 1
    %v36 = vmax.f32 %v34, %v35
    %v37 = vsel %vm29, %v28, -inf
    %v38 = vrot.slane %v37, 4
    %v39 = vmax.f32 %v37, %v38
    %v40 = vrot.slane %v39, 2
    %v41 = vmax.f32 %v39, %v40
    %v42 = vrot.slane %v41, 1
    %v43 = vmax.f32 %v41, %v42
    %p44 = scmp.eq.s32.totalorder 0, 0
    // Predicated region
    $region10: #{tpu_custom_call.1} parent=1 // pred_check
      %p45 = pneg %p44
    $region11: #{tpu_custom_call.1} parent=1 // pred_check_branch
      %47 = sbr.rel (%p45) target = $region13
    $region12: #{tpu_custom_call.1} parent=1 // pred_region
      %vm50 = vcmask 1041409
      %v51 = vsel %vm50, %v43, %v36
      %vm53 = vcmask 254976
      %54 = vst.msk [vmem:[#allocation5] sm:$0x3] %vm53, %v51
    $region13: #{tpu_custom_call.1} parent=1 // pred_fallthru
      _
    %p55 = scmp.ne.s32.totalorder 0, 0
    // Predicated region
    $region14: #{tpu_custom_call.1} parent=1 // pred_check
      %p56 = pneg %p55
    $region15: #{tpu_custom_call.1} parent=1 // pred_check_branch
      %58 = sbr.rel (%p56) target = $region17
    $region16: #{tpu_custom_call.1} parent=1 // pred_region
      %v59 = vld [vmem:[#allocation5] sm:$0x3]
      %vm62 = vcmask 1041409
      %v63 = vsel %vm62, %v43, %v36
      %v65 = vmax.f32 %v59, %v63
      %vm66 = vcmask 254976
      %67 = vst.msk [vmem:[#allocation5] sm:$0x3] %vm66, %v65
    $region17: #{tpu_custom_call.1} parent=1 // pred_fallthru
      _
    // Predicated region
    $region18: #{tpu_custom_call.1} parent=1 // pred_check
      _
    $region19: #{tpu_custom_call.1} parent=1 // pred_check_branch
      %69 = sbr.rel (0) target = $region21
    $region20: #{tpu_custom_call.1} parent=1 // pred_region
      %s71 = ssub.s32 32, 32
      %72 = vsyncadd [#allocation4], %s71
      %s74 = sshll.u32 [#allocation5], 4
      %s75 = int_to_ptr.vmem [resolvable:$true] %s74
      %77 = dma.vmem_to_hbm [thread:$0]  %s75, 32, %s1, [#allocation4]
    $region21: #{tpu_custom_call.1} parent=1 // pred_fallthru
      _
    // Predicated region
    $region22: #{tpu_custom_call.1} parent=1 // pred_check
      _
    $region23: #{tpu_custom_call.1} parent=1 // pred_check_branch
      %79 = sbr.rel (0) target = $region25
    $region24: #{tpu_custom_call.1} parent=1 // pred_region
      %80 = dma.done [#allocation4], 32
    $region25: #{tpu_custom_call.1} parent=1 // pred_fallthru
      _
    %81 = vsyncpa [#allocation3], 1
    %82 = vsyncpa [#allocation4], 1

</llo_original>
